<compile_context>
chip_gen: v7x
topology: tpu7x:2x2x1
jax: 0.10.0
libtpu: 0.0.40
codegen_flags: <defaults>
</compile_context>

<pallas_src>
import functools

import jax
import jax.numpy as jnp
from jax.experimental import pallas as pl
from jax.experimental.pallas import tpu as pltpu


def _round_up(n: int, m: int) -> int:
    return (n + m - 1) // m * m


def _policy_kernel(x_ref, w1_ref, b1_ref, w2_ref, b2_ref,
                   wm_ref, bm_ref, ws_ref, bs_ref,
                   mean_ref, std_ref):
    # x tile arrives f32 straight from HBM (no wrapper pre-pass); cast to bf16
    # only for the MXU operands.
    x = x_ref[...].astype(jnp.bfloat16)

    # shared_fc: Linear -> Tanh -> Linear -> Tanh
    # bf16 matmul operands (MXU-native on v5e/v6e/v7x), f32 accumulation,
    # bias-add + tanh kept in f32.
    h1 = jnp.tanh(
        jnp.dot(x, w1_ref[...], preferred_element_type=jnp.float32) + b1_ref[...]
    )
    h2 = jnp.tanh(
        jnp.dot(h1.astype(jnp.bfloat16), w2_ref[...],
                preferred_element_type=jnp.float32) + b2_ref[...]
    )
    h2b = h2.astype(jnp.bfloat16)

    # Heads: two tiny matmuls (K=hidden, N=action_dim).  Keeping them separate
    # (rather than a fused [hidden, 2A] weight) means each head writes straight
    # to its own narrow output block with no in-kernel lane shuffle / mask, and
    # exp() touches only the A std lanes (EUP slot, effectively free).
    mean_ref[...] = (
        jnp.dot(h2b, wm_ref[...], preferred_element_type=jnp.float32) + bm_ref[...]
    )
    std_ref[...] = jnp.exp(
        jnp.dot(h2b, ws_ref[...], preferred_element_type=jnp.float32) + bs_ref[...]
    )


def policy_network_forward(x, params, *, block_batch: int = 2048,
                           core_parallel: bool = False):
    """x: [batch, state_dim] f32 -> (mean [batch, action_dim], std [batch, action_dim]).

    core_parallel=True requests an explicit per-TensorCore split of the batch
    axis (v7x); leave False on single-TC chips (v5e/v6e).
    """
    w1, b1, w2, b2, wm, bm, ws, bs = params
    batch, state_dim = x.shape
    hidden_dim = w1.shape[1]
    action_dim = wm.shape[1]

    # Weights cast to bf16 once in the wrapper (a few KiB, DMA'd once and then
    # VMEM-resident via constant index maps).  Biases stay f32.
    w1b = w1.astype(jnp.bfloat16)
    w2b = w2.astype(jnp.bfloat16)
    wmb = wm.astype(jnp.bfloat16)
    wsb = ws.astype(jnp.bfloat16)

    # ---- batch tiling (no feature padding; batch-edge padding only if needed) ----
    if batch <= block_batch:
        if batch >= 16:
            # >=2 grid steps so both v7x TensorCores get work on small batches.
            tb = _round_up(-(-batch // 2), 8)
        else:
            tb = _round_up(batch, 8)
    else:
        tb = block_batch
    padded_batch = _round_up(batch, tb)
    x_in = x if padded_batch == batch else jnp.pad(
        x, ((0, padded_batch - batch), (0, 0)))
    grid = (padded_batch // tb,)

    row = lambda i: (i, 0)      # x / outputs tile along batch
    const = lambda i: (0, 0)    # weights & biases stay resident

    head_flops = 2 * hidden_dim * action_dim
    flops = 2 * padded_batch * (state_dim * hidden_dim
                                + hidden_dim * hidden_dim) + 2 * padded_batch * head_flops
    transcendentals = padded_batch * (2 * hidden_dim + action_dim)
    bytes_accessed = (
        padded_batch * state_dim * 4                       # x read (f32)
        + 2 * padded_batch * action_dim * 4                # mean + std write (f32)
        + 2 * (state_dim * hidden_dim + hidden_dim * hidden_dim
               + 2 * hidden_dim * action_dim)              # bf16 weights
        + 4 * (2 * hidden_dim + 2 * action_dim)            # f32 biases
    )

    dim_sem = (pltpu.CORE_PARALLEL,) if core_parallel else ("parallel",)

    mean, std = pl.pallas_call(
        _policy_kernel,
        out_shape=(
            jax.ShapeDtypeStruct((padded_batch, action_dim), jnp.float32),
            jax.ShapeDtypeStruct((padded_batch, action_dim), jnp.float32),
        ),
        grid_spec=pltpu.PrefetchScalarGridSpec(
            num_scalar_prefetch=0,
            grid=grid,
            in_specs=[
                pl.BlockSpec((tb, state_dim), row),            # x tile (unpadded K=27)
                pl.BlockSpec((state_dim, hidden_dim), const),  # W1 (bf16)
                pl.BlockSpec((1, hidden_dim), const),          # b1
                pl.BlockSpec((hidden_dim, hidden_dim), const), # W2 (bf16)
                pl.BlockSpec((1, hidden_dim), const),          # b2
                pl.BlockSpec((hidden_dim, action_dim), const), # Wm (bf16)
                pl.BlockSpec((1, action_dim), const),          # bm
                pl.BlockSpec((hidden_dim, action_dim), const), # Ws (bf16)
                pl.BlockSpec((1, action_dim), const),          # bs
            ],
            out_specs=[
                pl.BlockSpec((tb, action_dim), row),           # mean
                pl.BlockSpec((tb, action_dim), row),           # std
            ],
        ),
        compiler_params=pltpu.CompilerParams(
            dimension_semantics=dim_sem,
            vmem_limit_bytes=32 * 1024 * 1024,
        ),
        cost_estimate=pl.CostEstimate(
            flops=flops,
            transcendentals=transcendentals,
            bytes_accessed=bytes_accessed,
        ),
    )(x_in, w1b, b1, w2b, b2, wmb, bm, wsb, bs)

    if padded_batch != batch:
        mean = mean[:batch]
        std = std[:batch]
    return mean, std


def init_params(key, state_dim, hidden_dim, action_dim):
    """Deterministic synthetic init (PyTorch-like uniform bounds), weights stored [in, out]."""
    def linear(key, fan_in, fan_out):
        kw, kb = jax.random.split(key)
        bound = 1.0 / (fan_in ** 0.5)
        w = jax.random.uniform(kw, (fan_in, fan_out), jnp.float32, -bound, bound)
        b = jax.random.uniform(kb, (1, fan_out), jnp.float32, -bound, bound)
        return w, b

    k1, k2, k3, k4 = jax.random.split(key, 4)
    w1, b1 = linear(k1, state_dim, hidden_dim)
    w2, b2 = linear(k2, hidden_dim, hidden_dim)
    wm, bm = linear(k3, hidden_dim, action_dim)
    ws, bs = linear(k4, hidden_dim, action_dim)
    return (w1, b1, w2, b2, wm, bm, ws, bs)


def _reference_f32(x, params):
    """Exact PyTorch-semantics reference (full f32)."""
    w1, b1, w2, b2, wm, bm, ws, bs = params
    h = jnp.tanh(x @ w1 + b1)
    h = jnp.tanh(h @ w2 + b2)
    return h @ wm + bm, jnp.exp(h @ ws + bs)


def _reference_bf16_matmul(x, params):
    """Reference with the same bf16-operand / f32-accumulate matmul precision as the kernel."""
    w1, b1, w2, b2, wm, bm, ws, bs = params
    bf = jnp.bfloat16
    dot = lambda a, b: jnp.dot(a.astype(bf), b.astype(bf),
                               preferred_element_type=jnp.float32)
    h = jnp.tanh(dot(x, w1) + b1)
    h = jnp.tanh(dot(h, w2) + b2)
    return dot(h, wm) + bm, jnp.exp(dot(h, ws) + bs)


def _check(mean, std, x, params, batch, action_dim):
    ref_m_bf, ref_s_bf = _reference_bf16_matmul(x, params)
    ref_m_f32, ref_s_f32 = _reference_f32(x, params)
    assert mean.shape == (batch, action_dim) and std.shape == (batch, action_dim)
    # Tight check against a matched-precision (bf16-operand) reference.
    assert bool(jnp.allclose(mean, ref_m_bf, atol=2e-3, rtol=2e-3))
    assert bool(jnp.allclose(std, ref_s_bf, atol=2e-3, rtol=2e-3))
    # Loose check against the exact f32 PyTorch semantics (bf16 operand rounding).
    assert bool(jnp.allclose(mean, ref_m_f32, atol=5e-2, rtol=5e-2))
    assert bool(jnp.allclose(std, ref_s_f32, atol=5e-2, rtol=5e-2))
    assert bool(jnp.all(std > 0))


if __name__ == "__main__":
    # Shapes implied by the module's type hints: state_dim=27, action_dim=8.
    state_dim, hidden_dim, action_dim = 27, 32, 8

    key = jax.random.PRNGKey(0)
    kx1, kx2, kp = jax.random.split(key, 3)
    params = init_params(kp, state_dim, hidden_dim, action_dim)

    # Case 1: tiny batch (single grid step).
    batch = 8
    x = jax.random.normal(kx1, (batch, state_dim), dtype=jnp.float32)
    fwd = jax.jit(policy_network_forward)
    mean, std = fwd(x, params)
    jax.block_until_ready((mean, std))
    _check(mean, std, x, params, batch, action_dim)

    # Case 2: ragged batch exercising the tiled/padded grid path (3 tiles of 128).
    batch2 = 300
    x2 = jax.random.normal(kx2, (batch2, state_dim), dtype=jnp.float32)
    fwd_tiled = jax.jit(functools.partial(policy_network_forward, block_batch=128))
    mean2, std2 = fwd_tiled(x2, params)
    jax.block_until_ready((mean2, std2))
    _check(mean2, std2, x2, params, batch2, action_dim)

    print("KERNEL_OK")
</pallas_src>

<mosaic_0001>
module attributes {stable_mosaic.version = 11 : i64} {
  func.func @_policy_kernel(%arg0: i32, %arg1: memref<8x27xf32, #tpu.memory_space<vmem>>, %arg2: memref<27x32xbf16, #tpu.memory_space<vmem>>, %arg3: memref<1x32xf32, #tpu.memory_space<vmem>>, %arg4: memref<32x32xbf16, #tpu.memory_space<vmem>>, %arg5: memref<1x32xf32, #tpu.memory_space<vmem>>, %arg6: memref<32x8xbf16, #tpu.memory_space<vmem>>, %arg7: memref<1x8xf32, #tpu.memory_space<vmem>>, %arg8: memref<32x8xbf16, #tpu.memory_space<vmem>>, %arg9: memref<1x8xf32, #tpu.memory_space<vmem>>, %arg10: memref<8x8xf32, #tpu.memory_space<vmem>>, %arg11: memref<8x8xf32, #tpu.memory_space<vmem>>) attributes {dimension_semantics = [#tpu.dimension_semantics<parallel>], iteration_bounds = array<i64: 1>, scalar_prefetch = 0 : i64, scratch_operands = 0 : i64, tpu.core_type = #tpu.core_type<tc>, window_params = [{transform_indices = @transform_0, window_bounds = array<i64: 8, 27>}, {pipeline_mode = #tpu.pipeline_mode<synchronous>, transform_indices = @transform_1, window_bounds = array<i64: 27, 32>}, {pipeline_mode = #tpu.pipeline_mode<synchronous>, transform_indices = @transform_2, window_bounds = array<i64: 1, 32>}, {pipeline_mode = #tpu.pipeline_mode<synchronous>, transform_indices = @transform_3, window_bounds = array<i64: 32, 32>}, {pipeline_mode = #tpu.pipeline_mode<synchronous>, transform_indices = @transform_4, window_bounds = array<i64: 1, 32>}, {pipeline_mode = #tpu.pipeline_mode<synchronous>, transform_indices = @transform_5, window_bounds = array<i64: 32, 8>}, {pipeline_mode = #tpu.pipeline_mode<synchronous>, transform_indices = @transform_6, window_bounds = array<i64: 1, 8>}, {pipeline_mode = #tpu.pipeline_mode<synchronous>, transform_indices = @transform_7, window_bounds = array<i64: 32, 8>}, {pipeline_mode = #tpu.pipeline_mode<synchronous>, transform_indices = @transform_8, window_bounds = array<i64: 1, 8>}, {transform_indices = @transform_9, window_bounds = array<i64: 8, 8>}, {transform_indices = @transform_10, window_bounds = array<i64: 8, 8>}]} {
    %c0 = arith.constant 0 : index
    %c0_0 = arith.constant 0 : index
    %0 = vector.load %arg1[%c0, %c0_0] : memref<8x27xf32, #tpu.memory_space<vmem>>, vector<8x27xf32>
    %1 = arith.truncf %0 : vector<8x27xf32> to vector<8x27xbf16>
    %c0_1 = arith.constant 0 : index
    %c0_2 = arith.constant 0 : index
    %2 = vector.load %arg2[%c0_1, %c0_2] : memref<27x32xbf16, #tpu.memory_space<vmem>>, vector<27x32xbf16>
    %cst = arith.constant dense<0.000000e+00> : vector<8x32xf32>
    %3 = tpu.matmul %1, %2, %cst {dimension_numbers = #tpu.dot_dimension_numbers<[1], [0], [0], [1], [0, 0, 1, 1], [], []>} : vector<8x27xbf16>, vector<27x32xbf16>, vector<8x32xf32> -> vector<8x32xf32>
    %c0_3 = arith.constant 0 : index
    %c0_4 = arith.constant 0 : index
    %4 = vector.load %arg3[%c0_3, %c0_4] : memref<1x32xf32, #tpu.memory_space<vmem>>, vector<1x32xf32>
    %5 = vector.broadcast %4 : vector<1x32xf32> to vector<8x32xf32>
    %6 = arith.addf %3, %5 : vector<8x32xf32>
    %7 = math.tanh %6 : vector<8x32xf32>
    %8 = arith.truncf %7 : vector<8x32xf32> to vector<8x32xbf16>
    %c0_5 = arith.constant 0 : index
    %c0_6 = arith.constant 0 : index
    %9 = vector.load %arg4[%c0_5, %c0_6] : memref<32x32xbf16, #tpu.memory_space<vmem>>, vector<32x32xbf16>
    %cst_7 = arith.constant dense<0.000000e+00> : vector<8x32xf32>
    %10 = tpu.matmul %8, %9, %cst_7 {dimension_numbers = #tpu.dot_dimension_numbers<[1], [0], [0], [1], [0, 0, 1, 1], [], []>} : vector<8x32xbf16>, vector<32x32xbf16>, vector<8x32xf32> -> vector<8x32xf32>
    %c0_8 = arith.constant 0 : index
    %c0_9 = arith.constant 0 : index
    %11 = vector.load %arg5[%c0_8, %c0_9] : memref<1x32xf32, #tpu.memory_space<vmem>>, vector<1x32xf32>
    %12 = vector.broadcast %11 : vector<1x32xf32> to vector<8x32xf32>
    %13 = arith.addf %10, %12 : vector<8x32xf32>
    %14 = math.tanh %13 : vector<8x32xf32>
    %15 = arith.truncf %14 : vector<8x32xf32> to vector<8x32xbf16>
    %c0_10 = arith.constant 0 : index
    %c0_11 = arith.constant 0 : index
    %16 = vector.load %arg6[%c0_10, %c0_11] : memref<32x8xbf16, #tpu.memory_space<vmem>>, vector<32x8xbf16>
    %cst_12 = arith.constant dense<0.000000e+00> : vector<8x8xf32>
    %17 = tpu.matmul %15, %16, %cst_12 {dimension_numbers = #tpu.dot_dimension_numbers<[1], [0], [0], [1], [0, 0, 1, 1], [], []>} : vector<8x32xbf16>, vector<32x8xbf16>, vector<8x8xf32> -> vector<8x8xf32>
    %c0_13 = arith.constant 0 : index
    %c0_14 = arith.constant 0 : index
    %18 = vector.load %arg7[%c0_13, %c0_14] : memref<1x8xf32, #tpu.memory_space<vmem>>, vector<1x8xf32>
    %19 = vector.broadcast %18 : vector<1x8xf32> to vector<8x8xf32>
    %20 = arith.addf %17, %19 : vector<8x8xf32>
    %c0_15 = arith.constant 0 : index
    %c0_16 = arith.constant 0 : index
    %21 = vector.load %arg10[%c0_15, %c0_16] : memref<8x8xf32, #tpu.memory_space<vmem>>, vector<8x8xf32>
    tpu.vector_store %arg10[%c0_15, %c0_16], %20 {strides = array<i32>} : memref<8x8xf32, #tpu.memory_space<vmem>>, vector<8x8xf32>,
    %c0_17 = arith.constant 0 : index
    %c0_18 = arith.constant 0 : index
    %22 = vector.load %arg8[%c0_17, %c0_18] : memref<32x8xbf16, #tpu.memory_space<vmem>>, vector<32x8xbf16>
    %cst_19 = arith.constant dense<0.000000e+00> : vector<8x8xf32>
    %23 = tpu.matmul %15, %22, %cst_19 {dimension_numbers = #tpu.dot_dimension_numbers<[1], [0], [0], [1], [0, 0, 1, 1], [], []>} : vector<8x32xbf16>, vector<32x8xbf16>, vector<8x8xf32> -> vector<8x8xf32>
    %c0_20 = arith.constant 0 : index
    %c0_21 = arith.constant 0 : index
    %24 = vector.load %arg9[%c0_20, %c0_21] : memref<1x8xf32, #tpu.memory_space<vmem>>, vector<1x8xf32>
    %25 = vector.broadcast %24 : vector<1x8xf32> to vector<8x8xf32>
    %26 = arith.addf %23, %25 : vector<8x8xf32>
    %27 = math.exp %26 : vector<8x8xf32>
    %c0_22 = arith.constant 0 : index
    %c0_23 = arith.constant 0 : index
    %28 = vector.load %arg11[%c0_22, %c0_23] : memref<8x8xf32, #tpu.memory_space<vmem>>, vector<8x8xf32>
    tpu.vector_store %arg11[%c0_22, %c0_23], %27 {strides = array<i32>} : memref<8x8xf32, #tpu.memory_space<vmem>>, vector<8x8xf32>,
    return
  }
  func.func @transform_0(%arg0: i32) -> (i32, i32) {
    %c0_i32 = arith.constant 0 : i32
    %c0_i32_0 = arith.constant 0 : i32
    return %arg0, %c0_i32 : i32, i32
  }
  func.func @transform_1(%arg0: i32) -> (i32, i32) {
    %c0_i32 = arith.constant 0 : i32
    %c0_i32_0 = arith.constant 0 : i32
    %c0_i32_1 = arith.constant 0 : i32
    return %c0_i32, %c0_i32_0 : i32, i32
  }
  func.func @transform_2(%arg0: i32) -> (i32, i32) {
    %c0_i32 = arith.constant 0 : i32
    %c0_i32_0 = arith.constant 0 : i32
    %c0_i32_1 = arith.constant 0 : i32
    return %c0_i32, %c0_i32_0 : i32, i32
  }
  func.func @transform_3(%arg0: i32) -> (i32, i32) {
    %c0_i32 = arith.constant 0 : i32
    %c0_i32_0 = arith.constant 0 : i32
    %c0_i32_1 = arith.constant 0 : i32
    return %c0_i32, %c0_i32_0 : i32, i32
  }
  func.func @transform_4(%arg0: i32) -> (i32, i32) {
    %c0_i32 = arith.constant 0 : i32
    %c0_i32_0 = arith.constant 0 : i32
    %c0_i32_1 = arith.constant 0 : i32
    return %c0_i32, %c0_i32_0 : i32, i32
  }
  func.func @transform_5(%arg0: i32) -> (i32, i32) {
    %c0_i32 = arith.constant 0 : i32
    %c0_i32_0 = arith.constant 0 : i32
    %c0_i32_1 = arith.constant 0 : i32
    return %c0_i32, %c0_i32_0 : i32, i32
  }
  func.func @transform_6(%arg0: i32) -> (i32, i32) {
    %c0_i32 = arith.constant 0 : i32
    %c0_i32_0 = arith.constant 0 : i32
    %c0_i32_1 = arith.constant 0 : i32
    return %c0_i32, %c0_i32_0 : i32, i32
  }
  func.func @transform_7(%arg0: i32) -> (i32, i32) {
    %c0_i32 = arith.constant 0 : i32
    %c0_i32_0 = arith.constant 0 : i32
    %c0_i32_1 = arith.constant 0 : i32
    return %c0_i32, %c0_i32_0 : i32, i32
  }
  func.func @transform_8(%arg0: i32) -> (i32, i32) {
    %c0_i32 = arith.constant 0 : i32
    %c0_i32_0 = arith.constant 0 : i32
    %c0_i32_1 = arith.constant 0 : i32
    return %c0_i32, %c0_i32_0 : i32, i32
  }
  func.func @transform_9(%arg0: i32) -> (i32, i32) {
    %c0_i32 = arith.constant 0 : i32
    %c0_i32_0 = arith.constant 0 : i32
    return %arg0, %c0_i32 : i32, i32
  }
  func.func @transform_10(%arg0: i32) -> (i32, i32) {
    %c0_i32 = arith.constant 0 : i32
    %c0_i32_0 = arith.constant 0 : i32
    return %arg0, %c0_i32 : i32, i32
  }
}

</mosaic_0001>

<llo_original>
// kernel: policy_network_forward.1
$region0: #{policy_network_forward.1}
  #allocation0 [shape = 'u32[]', space=smem, size = 0x4, offset = 0x4, fixed_abs, tag = 'smem constant byte address 0x4 - core index']
  #allocation1 [shape = 'u32[144,128]{1,0:T(1,128)}', space=vmem, size = 0x12000, scoped, tag = 'internal scratch']
  %s0 = inlined_call_operand.vmem [shape: f32[8,27], index: 0, kind: input, shape index: {}]
  %s1 = inlined_call_operand.vmem [shape: bf16[27,32], index: 1, kind: input, shape index: {}]
  %s2 = inlined_call_operand.vmem [shape: f32[1,32], index: 2, kind: input, shape index: {}]
  %s3 = inlined_call_operand.vmem [shape: bf16[32,32], index: 3, kind: input, shape index: {}]
  %s4 = inlined_call_operand.vmem [shape: f32[1,32], index: 4, kind: input, shape index: {}]
  %s5 = inlined_call_operand.vmem [shape: bf16[32,8], index: 5, kind: input, shape index: {}]
  %s6 = inlined_call_operand.vmem [shape: f32[1,8], index: 6, kind: input, shape index: {}]
  %s7 = inlined_call_operand.vmem [shape: bf16[32,8], index: 7, kind: input, shape index: {}]
  %s8 = inlined_call_operand.vmem [shape: f32[1,8], index: 8, kind: input, shape index: {}]
  %s9 = inlined_call_operand.hbm [shape: f32[8,8], index: 9, kind: output, shape index: {0}]
  %s10 = inlined_call_operand.hbm [shape: f32[8,8], index: 10, kind: output, shape index: {1}]
  %11 = xla_tuple %s9, %s10
  %s12 = sld [smem:[#allocation0]]
  $region54: #{policy_network_forward.1} parent=0
    _
  %s14 = ssub.s32 1, %s12
  %s15 = scalar_select 0, %s14, %s12
  $region1: #{policy_network_forward.1} parent=0
    #allocation2 [shape = 'u8[4096]{0}', space=vmem, size = 0x1000, scoped, tag = 'output window, operand 0, single buffered']
    #allocation3 [shape = 's32[1]{0}', space=sflag, size = 0x4, scoped, tag = 'scoped memory for policy_network_forward.1']
    #allocation4 [shape = 'u8[4096]{0}', space=vmem, size = 0x1000, scoped, tag = 'output window, operand 1, single buffered']
    #allocation5 [shape = 's32[1]{0}', space=sflag, size = 0x4, scoped, tag = 'scoped memory for policy_network_forward.1']
    %16 = vsyncpa [#allocation3], 0
    %17 = vsyncpa [#allocation5], 0
    // Predicated region
    $region2: #{policy_network_forward.1} parent=1 // pred_check
      _
    $region3: #{policy_network_forward.1} parent=1 // pred_check_branch
      %19 = sbr.rel (0) target = $region5
    $region4: #{policy_network_forward.1} parent=1 // pred_region
      _
    $region5: #{policy_network_forward.1} parent=1 // pred_fallthru
      _
    // Predicated region
    $region6: #{policy_network_forward.1} parent=1 // pred_check
      _
    $region7: #{policy_network_forward.1} parent=1 // pred_check_branch
      %21 = sbr.rel (0) target = $region9
    $region8: #{policy_network_forward.1} parent=1 // pred_region
      _
    $region9: #{policy_network_forward.1} parent=1 // pred_fallthru
      _
    // Predicated region
    $region10: #{policy_network_forward.1} parent=1 // pred_check
      _
    $region11: #{policy_network_forward.1} parent=1 // pred_check_branch
      %23 = sbr.rel (0) target = $region13
    $region12: #{policy_network_forward.1} parent=1 // pred_region
      _
    $region13: #{policy_network_forward.1} parent=1 // pred_fallthru
      _
    // Predicated region
    $region14: #{policy_network_forward.1} parent=1 // pred_check
      _
    $region15: #{policy_network_forward.1} parent=1 // pred_check_branch
      %25 = sbr.rel (0) target = $region17
    $region16: #{policy_network_forward.1} parent=1 // pred_region
      _
    $region17: #{policy_network_forward.1} parent=1 // pred_fallthru
      _
    // Predicated region
    $region18: #{policy_network_forward.1} parent=1 // pred_check
      _
    $region19: #{policy_network_forward.1} parent=1 // pred_check_branch
      %27 = sbr.rel (0) target = $region21
    $region20: #{policy_network_forward.1} parent=1 // pred_region
      _
    $region21: #{policy_network_forward.1} parent=1 // pred_fallthru
      _
    // Predicated region
    $region22: #{policy_network_forward.1} parent=1 // pred_check
      _
    $region23: #{policy_network_forward.1} parent=1 // pred_check_branch
      %29 = sbr.rel (0) target = $region25
    $region24: #{policy_network_forward.1} parent=1 // pred_region
      _
    $region25: #{policy_network_forward.1} parent=1 // pred_fallthru
      _
    // Predicated region
    $region26: #{policy_network_forward.1} parent=1 // pred_check
      _
    $region27: #{policy_network_forward.1} parent=1 // pred_check_branch
      %31 = sbr.rel (0) target = $region29
    $region28: #{policy_network_forward.1} parent=1 // pred_region
      _
    $region29: #{policy_network_forward.1} parent=1 // pred_fallthru
      _
    // Predicated region
    $region30: #{policy_network_forward.1} parent=1 // pred_check
      _
    $region31: #{policy_network_forward.1} parent=1 // pred_check_branch
      %33 = sbr.rel (0) target = $region33
    $region32: #{policy_network_forward.1} parent=1 // pred_region
      _
    $region33: #{policy_network_forward.1} parent=1 // pred_fallthru
      _
    // Predicated region
    $region34: #{policy_network_forward.1} parent=1 // pred_check
      _
    $region35: #{policy_network_forward.1} parent=1 // pred_check_branch
      %35 = sbr.rel (0) target = $region37
    $region36: #{policy_network_forward.1} parent=1 // pred_region
      _
    $region37: #{policy_network_forward.1} parent=1 // pred_fallthru
      _
    %v37 = vld [vmem:[%s0] sm:$0xff]
    %v38 = vpack.c.bf16 %v37, %v37
    %v39 = vld [vmem:[%s1] sm:$0xf]
    %v40 = vld [vmem:[%s1 + $0x4] sm:$0xf]
    %v41 = vld [vmem:[%s1 + $0x8] sm:$0xf]
    %v42 = vld [vmem:[%s1 + $0xc] sm:$0x3]
    %v43 = vld [vmem:[%s2] sm:$0x1]
    %v45 = vlaneseq
    %v46 = vshrl.u32 %v45, 7
    %v47 = vsub.s32 0, %v46
    %v48 = vrot.slane %v43, %v47
    %v54 = vunpack.c.l.b16 %v39
    %v55 = vunpack.c.l.b16 %v40
    %v56 = vunpack.c.l.b16 %v41
    %v57 = vunpack.c.l.b16 %v42
    %v58 = vpack.c.b16 %v55, %v54
    %v59 = vpack.c.b16 %v57, %v56
    %vm61 = vcmask 220160
    %v63 = vsel %vm61, %v38, 0
    %vm65 = vcmask 1044480
    %vm66 = vcmask 1045504
    %v67 = vsel %vm65, 4294967295, 65535
    %v68 = vsel %vm66, %v67, 0
    %v70 = vand.u32 %v59, %v68
    %72 = vmatprep.subr.bf16.mxu0 0
    %73 = vmatpush1.bf16.msra.mxu0 %v58
    %74 = vmatprep.subr.bf16.mxu0 0
    %75 = vmatpush1.bf16.msra.mxu0 %v70
    %76 = vmatprep.subr.bf16.mxu0 0
    %77 = vmatpush1.bf16.msra.mxu0 0
    %78 = vmatprep.subr.bf16.mxu0 0
    %79 = vmatpush1.bf16.msra.mxu0 0
    %80 = vmatprep.subr.bf16.mxu0 0
    %81 = vmatpush1.bf16.msra.mxu0 0
    %82 = vmatprep.subr.bf16.mxu0 0
    %83 = vmatpush1.bf16.msra.mxu0 0
    %84 = vmatprep.subr.bf16.mxu0 0
    %85 = vmatpush1.bf16.msra.mxu0 0
    %86 = vmatprep.subr.bf16.mxu0 0
    %87 = vmatpush1.bf16.msra.mxu0 0
    %88 = vmatprep.subr.bf16.mxu0 0
    %89 = vmatpush1.bf16.msra.mxu0 0
    %90 = vmatprep.subr.bf16.mxu0 0
    %91 = vmatpush1.bf16.msra.mxu0 0
    %92 = vmatprep.subr.bf16.mxu0 0
    %93 = vmatpush1.bf16.msra.mxu0 0
    %94 = vmatprep.subr.bf16.mxu0 0
    %95 = vmatpush1.bf16.msra.mxu0 0
    %96 = vmatprep.subr.bf16.mxu0 0
    %97 = vmatpush1.bf16.msra.mxu0 0
    %98 = vmatprep.subr.bf16.mxu0 0
    %99 = vmatpush1.bf16.msra.mxu0 0
    %100 = vmatprep.subr.bf16.mxu0 0
    %101 = vmatpush1.bf16.msra.mxu0 0
    %102 = vmatprep.subr.bf16.mxu0 0
    %103 = vmatpush1.bf16.msra.mxu0 0
    %104 = vmatprep.mubr.bf16.mxu0 0
    %105 = vmatmul.mubr.bf16.gmra.mrb[0].mxu0 %v63
    %v106 = vpop.f32.mrb[0].mxu0
    %v107 = vadd.f32 %v48, %v106
    %v108 = vpop.f32.mrb[0].mxu0
    %v109 = vpop.f32.mrb[0].mxu0
    %v110 = vpop.f32.mrb[0].mxu0
    %111 = vdwg.mxu0
    %v112 = vtanh.pop %v107
    %v113 = vpack.c.bf16 %v112, %v112
    %v114 = vld [vmem:[%s3] sm:$0xf]
    %v115 = vld [vmem:[%s3 + $0x4] sm:$0xf]
    %v116 = vld [vmem:[%s3 + $0x8] sm:$0xf]
    %v117 = vld [vmem:[%s3 + $0xc] sm:$0xf]
    %v118 = vld [vmem:[%s4] sm:$0x1]
    %v120 = vlaneseq
    %v121 = vshrl.u32 %v120, 7
    %v122 = vsub.s32 0, %v121
    %v123 = vrot.slane %v118, %v122
    %v129 = vunpack.c.l.b16 %v114
    %v130 = vunpack.c.l.b16 %v115
    %v131 = vunpack.c.l.b16 %v116
    %v132 = vunpack.c.l.b16 %v117
    %v133 = vpack.c.b16 %v130, %v129
    %v134 = vpack.c.b16 %v132, %v131
    %vm137 = vcmask 261120
    %v139 = vsel %vm137, %v113, 0
    %141 = vmatprep.subr.bf16.mxu0 0
    %142 = vmatpush1.bf16.msra.mxu0 %v133
    %143 = vmatprep.subr.bf16.mxu0 0
    %144 = vmatpush1.bf16.msra.mxu0 %v134
    %145 = vmatprep.subr.bf16.mxu0 0
    %146 = vmatpush1.bf16.msra.mxu0 0
    %147 = vmatprep.subr.bf16.mxu0 0
    %148 = vmatpush1.bf16.msra.mxu0 0
    %149 = vmatprep.subr.bf16.mxu0 0
    %150 = vmatpush1.bf16.msra.mxu0 0
    %151 = vmatprep.subr.bf16.mxu0 0
    %152 = vmatpush1.bf16.msra.mxu0 0
    %153 = vmatprep.subr.bf16.mxu0 0
    %154 = vmatpush1.bf16.msra.mxu0 0
    %155 = vmatprep.subr.bf16.mxu0 0
    %156 = vmatpush1.bf16.msra.mxu0 0
    %157 = vmatprep.subr.bf16.mxu0 0
    %158 = vmatpush1.bf16.msra.mxu0 0
    %159 = vmatprep.subr.bf16.mxu0 0
    %160 = vmatpush1.bf16.msra.mxu0 0
    %161 = vmatprep.subr.bf16.mxu0 0
    %162 = vmatpush1.bf16.msra.mxu0 0
    %163 = vmatprep.subr.bf16.mxu0 0
    %164 = vmatpush1.bf16.msra.mxu0 0
    %165 = vmatprep.subr.bf16.mxu0 0
    %166 = vmatpush1.bf16.msra.mxu0 0
    %167 = vmatprep.subr.bf16.mxu0 0
    %168 = vmatpush1.bf16.msra.mxu0 0
    %169 = vmatprep.subr.bf16.mxu0 0
    %170 = vmatpush1.bf16.msra.mxu0 0
    %171 = vmatprep.subr.bf16.mxu0 0
    %172 = vmatpush1.bf16.msra.mxu0 0
    %173 = vmatprep.mubr.bf16.mxu0 0
    %174 = vmatmul.mubr.bf16.gmra.mrb[0].mxu0 %v139
    %v175 = vpop.f32.mrb[0].mxu0
    %v176 = vadd.f32 %v123, %v175
    %v177 = vpop.f32.mrb[0].mxu0
    %v178 = vpop.f32.mrb[0].mxu0
    %v179 = vpop.f32.mrb[0].mxu0
    %180 = vdwg.mxu0
    %v181 = vtanh.pop %v176
    %v182 = vpack.c.bf16 %v181, %v181
    %v183 = vld [vmem:[%s5] sm:$0xf]
    %v184 = vld [vmem:[%s5 + $0x4] sm:$0xf]
    %v185 = vld [vmem:[%s5 + $0x8] sm:$0xf]
    %v186 = vld [vmem:[%s5 + $0xc] sm:$0xf]
    %v187 = vld [vmem:[%s6] sm:$0x1]
    %v189 = vlaneseq
    %v190 = vshrl.u32 %v189, 7
    %v191 = vsub.s32 0, %v190
    %v192 = vrot.slane %v187, %v191
    %v198 = vunpack.c.l.b16 %v183
    %v199 = vunpack.c.l.b16 %v184
    %v200 = vunpack.c.l.b16 %v185
    %v201 = vunpack.c.l.b16 %v186
    %v202 = vpack.c.b16 %v199, %v198
    %v203 = vpack.c.b16 %v201, %v200
    %v207 = vsel %vm137, %v182, 0
    %209 = vmatprep.subr.bf16.mxu0 0
    %210 = vmatpush1.bf16.msra.mxu0 %v202
    %211 = vmatprep.subr.bf16.mxu0 0
    %212 = vmatpush1.bf16.msra.mxu0 %v203
    %213 = vmatprep.subr.bf16.mxu0 0
    %214 = vmatpush1.bf16.msra.mxu0 0
    %215 = vmatprep.subr.bf16.mxu0 0
    %216 = vmatpush1.bf16.msra.mxu0 0
    %217 = vmatprep.subr.bf16.mxu0 0
    %218 = vmatpush1.bf16.msra.mxu0 0
    %219 = vmatprep.subr.bf16.mxu0 0
    %220 = vmatpush1.bf16.msra.mxu0 0
    %221 = vmatprep.subr.bf16.mxu0 0
    %222 = vmatpush1.bf16.msra.mxu0 0
    %223 = vmatprep.subr.bf16.mxu0 0
    %224 = vmatpush1.bf16.msra.mxu0 0
    %225 = vmatprep.subr.bf16.mxu0 0
    %226 = vmatpush1.bf16.msra.mxu0 0
    %227 = vmatprep.subr.bf16.mxu0 0
    %228 = vmatpush1.bf16.msra.mxu0 0
    %229 = vmatprep.subr.bf16.mxu0 0
    %230 = vmatpush1.bf16.msra.mxu0 0
    %231 = vmatprep.subr.bf16.mxu0 0
    %232 = vmatpush1.bf16.msra.mxu0 0
    %233 = vmatprep.subr.bf16.mxu0 0
    %234 = vmatpush1.bf16.msra.mxu0 0
    %235 = vmatprep.subr.bf16.mxu0 0
    %236 = vmatpush1.bf16.msra.mxu0 0
    %237 = vmatprep.subr.bf16.mxu0 0
    %238 = vmatpush1.bf16.msra.mxu0 0
    %239 = vmatprep.subr.bf16.mxu0 0
    %240 = vmatpush1.bf16.msra.mxu0 0
    %241 = vmatprep.mubr.bf16.mxu0 0
    %242 = vmatmul.mubr.bf16.gmra.mrb[0].mxu0 %v207
    %v243 = vpop.f32.mrb[0].mxu0
    %v244 = vadd.f32 %v192, %v243
    %v245 = vpop.f32.mrb[0].mxu0
    %v246 = vpop.f32.mrb[0].mxu0
    %v247 = vpop.f32.mrb[0].mxu0
    %248 = vdwg.mxu0
    %vm249 = vcmask 64512
    %250 = vst.msk [vmem:[#allocation2] sm:$0xff] %vm249, %v244
    %v251 = vld [vmem:[%s7] sm:$0xf]
    %v252 = vld [vmem:[%s7 + $0x4] sm:$0xf]
    %v253 = vld [vmem:[%s7 + $0x8] sm:$0xf]
    %v254 = vld [vmem:[%s7 + $0xc] sm:$0xf]
    %v255 = vld [vmem:[%s8] sm:$0x1]
    %v257 = vlaneseq
    %v258 = vshrl.u32 %v257, 7
    %v259 = vsub.s32 0, %v258
    %v260 = vrot.slane %v255, %v259
    %v266 = vunpack.c.l.b16 %v251
    %v267 = vunpack.c.l.b16 %v252
    %v268 = vunpack.c.l.b16 %v253
    %v269 = vunpack.c.l.b16 %v254
    %v270 = vpack.c.b16 %v267, %v266
    %v271 = vpack.c.b16 %v269, %v268
    %274 = vmatprep.subr.bf16.mxu0 0
    %275 = vmatpush1.bf16.msra.mxu0 %v270
    %276 = vmatprep.subr.bf16.mxu0 0
    %277 = vmatpush1.bf16.msra.mxu0 %v271
    %278 = vmatprep.subr.bf16.mxu0 0
    %279 = vmatpush1.bf16.msra.mxu0 0
    %280 = vmatprep.subr.bf16.mxu0 0
    %281 = vmatpush1.bf16.msra.mxu0 0
    %282 = vmatprep.subr.bf16.mxu0 0
    %283 = vmatpush1.bf16.msra.mxu0 0
    %284 = vmatprep.subr.bf16.mxu0 0
    %285 = vmatpush1.bf16.msra.mxu0 0
    %286 = vmatprep.subr.bf16.mxu0 0
    %287 = vmatpush1.bf16.msra.mxu0 0
    %288 = vmatprep.subr.bf16.mxu0 0
    %289 = vmatpush1.bf16.msra.mxu0 0
    %290 = vmatprep.subr.bf16.mxu0 0
    %291 = vmatpush1.bf16.msra.mxu0 0
    %292 = vmatprep.subr.bf16.mxu0 0
    %293 = vmatpush1.bf16.msra.mxu0 0
    %294 = vmatprep.subr.bf16.mxu0 0
    %295 = vmatpush1.bf16.msra.mxu0 0
    %296 = vmatprep.subr.bf16.mxu0 0
    %297 = vmatpush1.bf16.msra.mxu0 0
    %298 = vmatprep.subr.bf16.mxu0 0
    %299 = vmatpush1.bf16.msra.mxu0 0
    %300 = vmatprep.subr.bf16.mxu0 0
    %301 = vmatpush1.bf16.msra.mxu0 0
    %302 = vmatprep.subr.bf16.mxu0 0
    %303 = vmatpush1.bf16.msra.mxu0 0
    %304 = vmatprep.subr.bf16.mxu0 0
    %305 = vmatpush1.bf16.msra.mxu0 0
    %306 = vmatprep.mubr.bf16.mxu0 0
    %307 = vmatmul.mubr.bf16.gmra.mrb[0].mxu0 %v207
    %v308 = vpop.f32.mrb[0].mxu0
    %v309 = vadd.f32 %v260, %v308
    %v310 = vpop.f32.mrb[0].mxu0
    %v311 = vpop.f32.mrb[0].mxu0
    %v312 = vpop.f32.mrb[0].mxu0
    %313 = vdwg.mxu0
    %v314 = vmul.f32 %v309, 1.442695
    %v315 = vpow.pop %v314
    %316 = vst.msk [vmem:[#allocation4] sm:$0xff] %vm249, %v315
    // Predicated region
    $region38: #{policy_network_forward.1} parent=1 // pred_check
      _
    $region39: #{policy_network_forward.1} parent=1 // pred_check_branch
      %318 = sbr.rel (0) target = $region41
    $region40: #{policy_network_forward.1} parent=1 // pred_region
      %s320 = ssub.s32 128, 128
      %321 = vsyncadd [#allocation3], %s320
      %s323 = sshll.u32 [#allocation2], 4
      %s324 = int_to_ptr.vmem [resolvable:$true] %s323
      %326 = dma.vmem_to_hbm [thread:$0]  %s324, 128, %s9, [#allocation3]
    $region41: #{policy_network_forward.1} parent=1 // pred_fallthru
      _
    // Predicated region
    $region42: #{policy_network_forward.1} parent=1 // pred_check
      _
    $region43: #{policy_network_forward.1} parent=1 // pred_check_branch
      %328 = sbr.rel (0) target = $region45
    $region44: #{policy_network_forward.1} parent=1 // pred_region
      %s330 = ssub.s32 128, 128
      %331 = vsyncadd [#allocation5], %s330
      %s333 = sshll.u32 [#allocation4], 4
      %s334 = int_to_ptr.vmem [resolvable:$true] %s333
      %336 = dma.vmem_to_hbm [thread:$0]  %s334, 128, %s10, [#allocation5]
    $region45: #{policy_network_forward.1} parent=1 // pred_fallthru
      _
    // Predicated region
    $region46: #{policy_network_forward.1} parent=1 // pred_check
      _
    $region47: #{policy_network_forward.1} parent=1 // pred_check_branch
      %338 = sbr.rel (0) target = $region49
    $region48: #{policy_network_forward.1} parent=1 // pred_region
      %339 = dma.done [#allocation3], 128
    $region49: #{policy_network_forward.1} parent=1 // pred_fallthru
      _
    // Predicated region
    $region50: #{policy_network_forward.1} parent=1 // pred_check
      _
    $region51: #{policy_network_forward.1} parent=1 // pred_check_branch
      %341 = sbr.rel (0) target = $region53
    $region52: #{policy_network_forward.1} parent=1 // pred_region
      %342 = dma.done [#allocation5], 128
    $region53: #{policy_network_forward.1} parent=1 // pred_fallthru
      _
    %343 = vsyncpa [#allocation3], 1
    %344 = vsyncpa [#allocation5], 1

</llo_original>
